<compile_context>
chip_gen: v5e
topology: v5e:2x2
jax: 0.10.0
libtpu: 0.0.40
codegen_flags: <defaults>
</compile_context>

<pallas_src>
import functools

import jax
import jax.numpy as jnp
from jax.experimental import pallas as pl
from jax.experimental.pallas import tpu as pltpu


def _round_up(a, b):
    return ((a + b - 1) // b) * b


def _hidden_epilogue_dtype():
    """bf16 bias-add/ReLU on the wide hidden layer for v6e/v7x; f32 on v5x
    (whose VALUs have no bf16 support)."""
    try:
        kind = jax.devices()[0].device_kind.lower()
    except Exception:
        kind = ""
    return jnp.float32 if "v5" in kind else jnp.bfloat16


def _block_diag(w, fold):
    """(In, Out) -> (fold*In, fold*Out) block-diagonal replication of w."""
    eye = jnp.eye(fold, dtype=w.dtype)
    big = jnp.einsum("ij,ab->iajb", eye, w)
    return big.reshape(fold * w.shape[0], fold * w.shape[1])


def _setnet_kernel(x_ref, w0_ref, b0_ref, w1_ref, b1_ref, out_ref):
    # One row-tile of the folded problem.
    #   x_ref : (TILE, F*C) f32    -> cast to bf16 after the VMEM load
    #   w0_ref: (F*C, F*L) bf16    b0_ref: (1, F*L) bf16|f32 (sets hidden epilogue dtype)
    #   w1_ref: (F*L, F*O) bf16    b1_ref: (1, F*O) f32
    #   out_ref: (TILE, F*O) f32|bf16
    b0 = b0_ref[...]          # hoisted: biases read once per grid step
    b1 = b1_ref[...]
    x = x_ref[...].astype(jnp.bfloat16)          # in-kernel cast (cheap VPU op)
    # fc0: bf16 MXU matmul, f32 accumulate.
    h = jnp.dot(x, w0_ref[...], preferred_element_type=jnp.float32)
    # Hidden bias + ReLU in b0's dtype (bf16 on v6e/v7x, f32 on v5e).
    h = jnp.maximum(h.astype(b0.dtype) + b0, 0.0)
    # fc1: bf16 MXU matmul, f32 accumulate; final bias/ReLU in f32 (128 lanes only).
    y = jnp.dot(h.astype(jnp.bfloat16), w1_ref[...],
                preferred_element_type=jnp.float32)
    y = jnp.maximum(y + b1, 0.0)
    out_ref[...] = y.astype(out_ref.dtype)


def _setnet_call(x, w0_big, b0_big, w1_big, b1_big, *, fold, latent_dim,
                 object_dim, out_dtype, tile_rows):
    B, N, C = x.shape
    F, L, O = fold, latent_dim, object_dim
    M = B * N

    # Fold F consecutive rows into one wide row.  For the module's shapes M is a
    # multiple of F, so this is a free row-major reshape (no pad, no output slice).
    pad = (-M) % F
    x2d = x.reshape(M, C)
    if pad:
        x2d = jnp.pad(x2d, ((0, pad), (0, 0)))   # rare fallback (< F rows)
    Mf = (M + pad) // F
    xf = x2d.reshape(Mf, F * C)                  # stays f32; cast inside the kernel

    # Adaptive row tile: aim for >= 8 grid steps (>= 4 per TensorCore under the
    # megacore split on v7x) so the BlockSpec pipeline really double-buffers;
    # multiple of 16 sublanes (covers bf16 output packing); capped at tile_rows so
    # the hidden intermediate stays small (no vmem_limit override, no in-kernel
    # chunking needed at tile<=512).
    tile = _round_up(max(pl.cdiv(Mf, 8), 1), 16)
    tile = min(tile, _round_up(tile_rows, 16), _round_up(Mf, 16))
    grid = (pl.cdiv(Mf, tile),)                  # ragged last block masked by Pallas

    out_isize = jnp.dtype(out_dtype).itemsize
    cost = pl.CostEstimate(
        # Actually-executed FLOPs of the block-diagonal matmuls.
        flops=2 * Mf * ((F * C) * (F * L) + (F * L) * (F * O)),
        transcendentals=0,
        bytes_accessed=(xf.size * 4 + Mf * F * O * out_isize
                        + w0_big.size * 2 + w1_big.size * 2
                        + b0_big.size * jnp.dtype(b0_big.dtype).itemsize
                        + b1_big.size * 4),
    )

    out_f = pl.pallas_call(
        _setnet_kernel,
        out_shape=jax.ShapeDtypeStruct((Mf, F * O), out_dtype),
        grid_spec=pltpu.PrefetchScalarGridSpec(
            num_scalar_prefetch=0,
            grid=grid,
            in_specs=[
                pl.BlockSpec((tile, F * C), lambda i: (i, 0)),    # streamed rows
                pl.BlockSpec((F * C, F * L), lambda i: (0, 0)),   # VMEM-resident
                pl.BlockSpec((1, F * L), lambda i: (0, 0)),       # VMEM-resident
                pl.BlockSpec((F * L, F * O), lambda i: (0, 0)),   # VMEM-resident
                pl.BlockSpec((1, F * O), lambda i: (0, 0)),       # VMEM-resident
            ],
            out_specs=pl.BlockSpec((tile, F * O), lambda i: (i, 0)),
        ),
        compiler_params=pltpu.CompilerParams(
            dimension_semantics=("parallel",)),   # row-tiles across TCs on v7x
        cost_estimate=cost,
    )(xf, w0_big, b0_big, w1_big, b1_big)

    out = out_f.reshape(M + pad, O)
    if pad:
        out = out[:M]
    out = out.reshape(B, N, O)
    # end = logit(ones(x.shape[1])) = +inf vector of length N (trivial; plain JAX).
    end = jnp.full((N,), jnp.inf, dtype=jnp.float32)
    return end, out


def make_setnet_forward(w0, b0, w1, b1, *, out_dtype=None, tile_rows=512):
    """Build the folded block-diagonal weights ONCE and return a jitted
    forward(x) -> (end, out).

    out_dtype=None keeps the module's f32 output; pass jnp.bfloat16 to halve the
    output-side HBM traffic (explicit accuracy trade-off vs. the f32 PyTorch module).
    """
    C, L = w0.shape
    O = w1.shape[1]
    out_dtype = jnp.float32 if out_dtype is None else out_dtype

    # Fold factor: F*O == 128 -> lane-dense unmasked output and a single 128-wide
    # MXU weight column for fc1 (v5e win); F*C stays <= 128.
    def _fold_of(d):
        return 128 // d if (0 < d <= 128 and 128 % d == 0) else 1
    F = max(1, min(_fold_of(C), _fold_of(O)))

    hid_dtype = _hidden_epilogue_dtype()

    w0_big = _block_diag(w0, F).astype(jnp.bfloat16)                  # (F*C, F*L)
    w1_big = _block_diag(w1, F).astype(jnp.bfloat16)                  # (F*L, F*O)
    b0_big = jnp.tile(b0, F).reshape(1, F * L).astype(hid_dtype)      # (1, F*L)
    b1_big = jnp.tile(b1, F).reshape(1, F * O).astype(jnp.float32)    # (1, F*O)

    call = jax.jit(functools.partial(
        _setnet_call, fold=F, latent_dim=L, object_dim=O,
        out_dtype=out_dtype, tile_rows=tile_rows))

    def forward(x):
        return call(x, w0_big, b0_big, w1_big, b1_big)

    return forward


def init_params(key, channel_dim, latent_dim, object_dim):
    """Deterministic PyTorch-Linear-style uniform init; weights stored as (in, out)."""
    k0w, k0b, k1w, k1b = jax.random.split(key, 4)
    bound0 = 1.0 / (channel_dim ** 0.5)
    bound1 = 1.0 / (latent_dim ** 0.5)
    w0 = jax.random.uniform(k0w, (channel_dim, latent_dim), jnp.float32, -bound0, bound0)
    b0 = jax.random.uniform(k0b, (latent_dim,), jnp.float32, -bound0, bound0)
    w1 = jax.random.uniform(k1w, (latent_dim, object_dim), jnp.float32, -bound1, bound1)
    b1 = jax.random.uniform(k1b, (object_dim,), jnp.float32, -bound1, bound1)
    return w0, b0, w1, b1


def _reference(x2d, w0, b0, w1, b1, hid_dtype):
    """Pure-JAX mirror of the kernel's bf16-operand / f32-accumulate numerics."""
    xb = x2d.astype(jnp.bfloat16).astype(jnp.float32)
    w0b = w0.astype(jnp.bfloat16).astype(jnp.float32)
    w1b = w1.astype(jnp.bfloat16).astype(jnp.float32)
    h = xb @ w0b
    h = jnp.maximum(h.astype(hid_dtype) + b0.astype(hid_dtype), 0.0)
    hb = h.astype(jnp.bfloat16).astype(jnp.float32)
    return jnp.maximum(hb @ w1b + b1, 0.0)


if __name__ == "__main__":
    latent_dim = 128           # fixed in SetNet.__init__
    object_dim = 32            # config.object_dim
    channel_dim = 16           # config.channel_dim

    key = jax.random.PRNGKey(0)
    kx, kp, kx2 = jax.random.split(key, 3)
    w0, b0, w1, b1 = init_params(kp, channel_dim, latent_dim, object_dim)
    hid_dtype = _hidden_epilogue_dtype()

    # Small shapes consistent with the module: batch=2, set size=8, channel_dim=16.
    B, N = 2, 8
    x = jax.random.normal(kx, (B, N, channel_dim), dtype=jnp.float32)
    forward = make_setnet_forward(w0, b0, w1, b1)           # f32 output (module-faithful)
    end, out = forward(x)
    jax.block_until_ready((end, out))

    assert out.shape == (B, N, object_dim)
    assert out.dtype == jnp.float32
    assert end.shape == (N,)
    assert bool(jnp.all(jnp.isinf(end)))
    ref = _reference(x.reshape(-1, channel_dim), w0, b0, w1, b1, hid_dtype)
    ref = ref.reshape(B, N, object_dim)
    assert jnp.allclose(out, ref, atol=5e-3, rtol=5e-3)

    # Larger batch: exercises the adaptive row tiling (grid of 8 x 256 folded rows)
    # and the bf16-output path that halves output HBM traffic.
    B2, N2 = 4, 2048
    x2 = jax.random.normal(kx2, (B2, N2, channel_dim), dtype=jnp.float32)
    forward_bf16 = make_setnet_forward(w0, b0, w1, b1, out_dtype=jnp.bfloat16)
    end2, out2 = forward_bf16(x2)
    jax.block_until_ready(out2)
    ref2 = _reference(x2.reshape(-1, channel_dim), w0, b0, w1, b1, hid_dtype)
    ref2 = ref2.reshape(B2, N2, object_dim)
    assert jnp.allclose(out2.astype(jnp.float32), ref2, atol=2e-2, rtol=2e-2)

    print("KERNEL_OK")
</pallas_src>

<mosaic_0001>
module attributes {stable_mosaic.version = 11 : i64} {
  func.func @_setnet_kernel(%arg0: i32, %arg1: memref<16x64xf32, #tpu.memory_space<vmem>>, %arg2: memref<64x512xbf16, #tpu.memory_space<vmem>>, %arg3: memref<1x512xbf16, #tpu.memory_space<vmem>>, %arg4: memref<512x128xbf16, #tpu.memory_space<vmem>>, %arg5: memref<1x128xf32, #tpu.memory_space<vmem>>, %arg6: memref<16x128xf32, #tpu.memory_space<vmem>>) attributes {dimension_semantics = [#tpu.dimension_semantics<parallel>], iteration_bounds = array<i64: 1>, scalar_prefetch = 0 : i64, scratch_operands = 0 : i64, tpu.core_type = #tpu.core_type<tc>, window_params = [{transform_indices = @transform_0, window_bounds = array<i64: 16, 64>}, {pipeline_mode = #tpu.pipeline_mode<synchronous>, transform_indices = @transform_1, window_bounds = array<i64: 64, 512>}, {pipeline_mode = #tpu.pipeline_mode<synchronous>, transform_indices = @transform_2, window_bounds = array<i64: 1, 512>}, {pipeline_mode = #tpu.pipeline_mode<synchronous>, transform_indices = @transform_3, window_bounds = array<i64: 512, 128>}, {pipeline_mode = #tpu.pipeline_mode<synchronous>, transform_indices = @transform_4, window_bounds = array<i64: 1, 128>}, {transform_indices = @transform_5, window_bounds = array<i64: 16, 128>}]} {
    %c0 = arith.constant 0 : index
    %c0_0 = arith.constant 0 : index
    %0 = vector.load %arg3[%c0, %c0_0] : memref<1x512xbf16, #tpu.memory_space<vmem>>, vector<1x512xbf16>
    %c0_1 = arith.constant 0 : index
    %c0_2 = arith.constant 0 : index
    %1 = vector.load %arg5[%c0_1, %c0_2] : memref<1x128xf32, #tpu.memory_space<vmem>>, vector<1x128xf32>
    %c0_3 = arith.constant 0 : index
    %c0_4 = arith.constant 0 : index
    %2 = vector.load %arg1[%c0_3, %c0_4] : memref<16x64xf32, #tpu.memory_space<vmem>>, vector<16x64xf32>
    %3 = arith.truncf %2 : vector<16x64xf32> to vector<16x64xbf16>
    %c0_5 = arith.constant 0 : index
    %c0_6 = arith.constant 0 : index
    %4 = vector.load %arg2[%c0_5, %c0_6] : memref<64x512xbf16, #tpu.memory_space<vmem>>, vector<64x512xbf16>
    %cst = arith.constant dense<0.000000e+00> : vector<16x512xf32>
    %5 = tpu.matmul %3, %4, %cst {dimension_numbers = #tpu.dot_dimension_numbers<[1], [0], [0], [1], [0, 0, 1, 1], [], []>} : vector<16x64xbf16>, vector<64x512xbf16>, vector<16x512xf32> -> vector<16x512xf32>
    %6 = arith.truncf %5 : vector<16x512xf32> to vector<16x512xbf16>
    %7 = vector.broadcast %0 : vector<1x512xbf16> to vector<16x512xbf16>
    %8 = arith.addf %6, %7 : vector<16x512xbf16>
    %cst_7 = arith.constant 0.000000e+00 : bf16
    %9 = vector.broadcast %cst_7 : bf16 to vector<16x512xbf16>
    %10 = arith.maximumf %8, %9 : vector<16x512xbf16>
    %c0_8 = arith.constant 0 : index
    %c0_9 = arith.constant 0 : index
    %11 = vector.load %arg4[%c0_8, %c0_9] : memref<512x128xbf16, #tpu.memory_space<vmem>>, vector<512x128xbf16>
    %cst_10 = arith.constant dense<0.000000e+00> : vector<16x128xf32>
    %12 = tpu.matmul %10, %11, %cst_10 {dimension_numbers = #tpu.dot_dimension_numbers<[1], [0], [0], [1], [0, 0, 1, 1], [], []>} : vector<16x512xbf16>, vector<512x128xbf16>, vector<16x128xf32> -> vector<16x128xf32>
    %13 = vector.broadcast %1 : vector<1x128xf32> to vector<16x128xf32>
    %14 = arith.addf %12, %13 : vector<16x128xf32>
    %cst_11 = arith.constant 0.000000e+00 : f32
    %15 = vector.broadcast %cst_11 : f32 to vector<16x128xf32>
    %16 = arith.maximumf %14, %15 : vector<16x128xf32>
    %c0_12 = arith.constant 0 : index
    %c0_13 = arith.constant 0 : index
    %17 = vector.load %arg6[%c0_12, %c0_13] : memref<16x128xf32, #tpu.memory_space<vmem>>, vector<16x128xf32>
    tpu.vector_store %arg6[%c0_12, %c0_13], %16 {strides = array<i32>} : memref<16x128xf32, #tpu.memory_space<vmem>>, vector<16x128xf32>,
    return
  }
  func.func @transform_0(%arg0: i32) -> (i32, i32) {
    %c0_i32 = arith.constant 0 : i32
    %c0_i32_0 = arith.constant 0 : i32
    return %arg0, %c0_i32 : i32, i32
  }
  func.func @transform_1(%arg0: i32) -> (i32, i32) {
    %c0_i32 = arith.constant 0 : i32
    %c0_i32_0 = arith.constant 0 : i32
    %c0_i32_1 = arith.constant 0 : i32
    return %c0_i32, %c0_i32_0 : i32, i32
  }
  func.func @transform_2(%arg0: i32) -> (i32, i32) {
    %c0_i32 = arith.constant 0 : i32
    %c0_i32_0 = arith.constant 0 : i32
    %c0_i32_1 = arith.constant 0 : i32
    return %c0_i32, %c0_i32_0 : i32, i32
  }
  func.func @transform_3(%arg0: i32) -> (i32, i32) {
    %c0_i32 = arith.constant 0 : i32
    %c0_i32_0 = arith.constant 0 : i32
    %c0_i32_1 = arith.constant 0 : i32
    return %c0_i32, %c0_i32_0 : i32, i32
  }
  func.func @transform_4(%arg0: i32) -> (i32, i32) {
    %c0_i32 = arith.constant 0 : i32
    %c0_i32_0 = arith.constant 0 : i32
    %c0_i32_1 = arith.constant 0 : i32
    return %c0_i32, %c0_i32_0 : i32, i32
  }
  func.func @transform_5(%arg0: i32) -> (i32, i32) {
    %c0_i32 = arith.constant 0 : i32
    %c0_i32_0 = arith.constant 0 : i32
    return %arg0, %c0_i32 : i32, i32
  }
}

</mosaic_0001>

<llo_original>
// kernel: _setnet_call.1
$region0: #{_setnet_call.1}
  #allocation0 [shape = 'u32[]', space=smem, size = 0x4, offset = 0x4, fixed_abs, tag = 'smem constant byte address 0x4 - core index']
  #allocation1 [shape = 'u32[72,128]{1,0:T(1,128)}', space=vmem, size = 0x9000, scoped, tag = 'internal scratch']
  %s0 = inlined_call_operand.vmem [shape: f32[4,64], index: 0, kind: input, shape index: {}]
  %s1 = inlined_call_operand.hbm [shape: bf16[64,512], index: 1, kind: input, shape index: {}]
  %s2 = inlined_call_operand.vmem [shape: bf16[1,512], index: 2, kind: input, shape index: {}]
  %s3 = inlined_call_operand.hbm [shape: bf16[512,128], index: 3, kind: input, shape index: {}]
  %s4 = inlined_call_operand.vmem [shape: f32[1,128], index: 4, kind: input, shape index: {}]
  %s5 = inlined_call_operand.vmem [shape: f32[4,128], index: 5, kind: output, shape index: {}]
  %s6 = sld [smem:[#allocation0]]
  $region68: #{_setnet_call.1} parent=0
    _
  %s8 = ssub.s32 1, %s6
  %s9 = scalar_select 0, %s8, %s6
  $region1: #{_setnet_call.1} parent=0
    #allocation2 [shape = 'u8[65536]{0}', space=vmem, size = 0x10000, scoped, tag = 'input window, operand 1, single buffered']
    #allocation3 [shape = 's32[1]{0}', space=sflag, size = 0x4, scoped, tag = 'scoped memory for _setnet_call.1']
    #allocation4 [shape = 'u8[131072]{0}', space=vmem, size = 0x20000, scoped, tag = 'input window, operand 3, single buffered']
    #allocation5 [shape = 's32[1]{0}', space=sflag, size = 0x4, scoped, tag = 'scoped memory for _setnet_call.1']
    #allocation6 [shape = 'u8[8192]{0}', space=vmem, size = 0x2000, scoped, tag = 'output window, operand 0, single buffered']
    %10 = vsyncpa [#allocation3], 0
    %11 = vsyncpa [#allocation5], 0
    // Predicated region
    $region2: #{_setnet_call.1} parent=1 // pred_check
      _
    $region3: #{_setnet_call.1} parent=1 // pred_check_branch
      %13 = sbr.rel (0) target = $region5
    $region4: #{_setnet_call.1} parent=1 // pred_region
      _
    $region5: #{_setnet_call.1} parent=1 // pred_fallthru
      _
    // Predicated region
    $region6: #{_setnet_call.1} parent=1 // pred_check
      _
    $region7: #{_setnet_call.1} parent=1 // pred_check_branch
      %15 = sbr.rel (0) target = $region9
    $region8: #{_setnet_call.1} parent=1 // pred_region
      %17 = vsyncadd [#allocation3], 0
      %s18 = sshll.u32 %s1, 4
      %s19 = int_to_ptr.hbm [resolvable:$true] %s18
      %s20 = sshll.u32 [#allocation2], 4
      %s21 = int_to_ptr.vmem [resolvable:$true] %s20
      %26 = dma.hbm_to_vmem [thread:$0]  %s19, 2048, %s21, [#allocation3], 256, 256, 16
    $region9: #{_setnet_call.1} parent=1 // pred_fallthru
      _
    // Predicated region
    $region10: #{_setnet_call.1} parent=1 // pred_check
      _
    $region11: #{_setnet_call.1} parent=1 // pred_check_branch
      %28 = sbr.rel (0) target = $region13
    $region12: #{_setnet_call.1} parent=1 // pred_region
      _
    $region13: #{_setnet_call.1} parent=1 // pred_fallthru
      _
    // Predicated region
    $region14: #{_setnet_call.1} parent=1 // pred_check
      _
    $region15: #{_setnet_call.1} parent=1 // pred_check_branch
      %30 = sbr.rel (0) target = $region17
    $region16: #{_setnet_call.1} parent=1 // pred_region
      %32 = vsyncadd [#allocation5], 0
      %s33 = sshll.u32 %s3, 4
      %s34 = int_to_ptr.hbm [resolvable:$true] %s33
      %s35 = sshll.u32 [#allocation4], 4
      %s36 = int_to_ptr.vmem [resolvable:$true] %s35
      %41 = dma.hbm_to_vmem [thread:$0]  %s34, 4096, %s36, [#allocation5], 64, 64, 4
    $region17: #{_setnet_call.1} parent=1 // pred_fallthru
      _
    // Predicated region
    $region18: #{_setnet_call.1} parent=1 // pred_check
      _
    $region19: #{_setnet_call.1} parent=1 // pred_check_branch
      %43 = sbr.rel (0) target = $region21
    $region20: #{_setnet_call.1} parent=1 // pred_region
      _
    $region21: #{_setnet_call.1} parent=1 // pred_fallthru
      _
    // Predicated region
    $region22: #{_setnet_call.1} parent=1 // pred_check
      _
    $region23: #{_setnet_call.1} parent=1 // pred_check_branch
      %45 = sbr.rel (0) target = $region25
    $region24: #{_setnet_call.1} parent=1 // pred_region
      %47 = dma.done [#allocation3], 2048
    $region25: #{_setnet_call.1} parent=1 // pred_fallthru
      _
    // Predicated region
    $region26: #{_setnet_call.1} parent=1 // pred_check
      _
    $region27: #{_setnet_call.1} parent=1 // pred_check_branch
      %49 = sbr.rel (0) target = $region29
    $region28: #{_setnet_call.1} parent=1 // pred_region
      %51 = dma.done [#allocation5], 4096
    $region29: #{_setnet_call.1} parent=1 // pred_fallthru
      _
    %v53 = vld [vmem:[%s2] sm:$0xf]
    %v54 = vld [vmem:[%s4] sm:$0x1]
    %v55 = vld [vmem:[%s0] sm:$0xff]
    %v56 = vld [vmem:[%s0 + $0x8] sm:$0xff]
    %v57 = vpack.c.bf16 %v56, %v55
    %v58 = vld [vmem:[#allocation2] sm:$0xff]
    %v59 = vld [vmem:[#allocation2 + $0x8] sm:$0xff]
    %v60 = vld [vmem:[#allocation2 + $0x10] sm:$0xff]
    %v61 = vld [vmem:[#allocation2 + $0x18] sm:$0xff]
    %v62 = vld [vmem:[#allocation2 + $0x20] sm:$0xff]
    %v63 = vld [vmem:[#allocation2 + $0x28] sm:$0xff]
    %v64 = vld [vmem:[#allocation2 + $0x30] sm:$0xff]
    %v65 = vld [vmem:[#allocation2 + $0x38] sm:$0xff]
    %v66 = vld [vmem:[#allocation2 + $0x40] sm:$0xff]
    %v67 = vld [vmem:[#allocation2 + $0x48] sm:$0xff]
    %v68 = vld [vmem:[#allocation2 + $0x50] sm:$0xff]
    %v69 = vld [vmem:[#allocation2 + $0x58] sm:$0xff]
    %v70 = vld [vmem:[#allocation2 + $0x60] sm:$0xff]
    %v71 = vld [vmem:[#allocation2 + $0x68] sm:$0xff]
    %v72 = vld [vmem:[#allocation2 + $0x70] sm:$0xff]
    %v73 = vld [vmem:[#allocation2 + $0x78] sm:$0xff]
    %v90 = vunpack.c.l.b16 %v58
    %v91 = vunpack.c.h.b16 %v58
    %v92 = vunpack.c.l.b16 %v59
    %v93 = vunpack.c.h.b16 %v59
    %v94 = vunpack.c.l.b16 %v60
    %v95 = vunpack.c.h.b16 %v60
    %v96 = vunpack.c.l.b16 %v61
    %v97 = vunpack.c.h.b16 %v61
    %v98 = vunpack.c.l.b16 %v62
    %v99 = vunpack.c.h.b16 %v62
    %v100 = vunpack.c.l.b16 %v63
    %v101 = vunpack.c.h.b16 %v63
    %v102 = vunpack.c.l.b16 %v64
    %v103 = vunpack.c.h.b16 %v64
    %v104 = vunpack.c.l.b16 %v65
    %v105 = vunpack.c.h.b16 %v65
    %v106 = vunpack.c.l.b16 %v66
    %v107 = vunpack.c.h.b16 %v66
    %v108 = vunpack.c.l.b16 %v67
    %v109 = vunpack.c.h.b16 %v67
    %v110 = vunpack.c.l.b16 %v68
    %v111 = vunpack.c.h.b16 %v68
    %v112 = vunpack.c.l.b16 %v69
    %v113 = vunpack.c.h.b16 %v69
    %v114 = vunpack.c.l.b16 %v70
    %v115 = vunpack.c.h.b16 %v70
    %v116 = vunpack.c.l.b16 %v71
    %v117 = vunpack.c.h.b16 %v71
    %v118 = vunpack.c.l.b16 %v72
    %v119 = vunpack.c.h.b16 %v72
    %v120 = vunpack.c.l.b16 %v73
    %v121 = vunpack.c.h.b16 %v73
    %v122 = vpack.c.b16 %v94, %v90
    %v123 = vpack.c.b16 %v95, %v91
    %v124 = vpack.c.b16 %v96, %v92
    %v125 = vpack.c.b16 %v97, %v93
    %v126 = vpack.c.b16 %v102, %v98
    %v127 = vpack.c.b16 %v103, %v99
    %v128 = vpack.c.b16 %v104, %v100
    %v129 = vpack.c.b16 %v105, %v101
    %v130 = vpack.c.b16 %v110, %v106
    %v131 = vpack.c.b16 %v111, %v107
    %v132 = vpack.c.b16 %v112, %v108
    %v133 = vpack.c.b16 %v113, %v109
    %v134 = vpack.c.b16 %v118, %v114
    %v135 = vpack.c.b16 %v119, %v115
    %v136 = vpack.c.b16 %v120, %v116
    %v137 = vpack.c.b16 %v121, %v117
    %vm154 = vcmask 523264
    %v156 = vsel %vm154, %v57, 0
    %158 = vmatpush.bf16.msra.mxu0 0
    %159 = vmatpush.bf16.msra.mxu0 0
    %160 = vmatpush.bf16.msra.mxu0 0
    %161 = vmatpush.bf16.msra.mxu0 0
    %162 = vmatpush.bf16.msra.mxu0 %v134
    %163 = vmatpush.bf16.msra.mxu0 %v130
    %164 = vmatpush.bf16.msra.mxu0 %v126
    %165 = vmatpush.bf16.msra.mxu0 %v122
    %166 = vmatmul.bf16.gmra.mxu0 %v156
    %v167 = vpop.f32.mrf.mxu0
    %v168 = vadd.f32 0.0, %v167
    %v169 = vpop.f32.mrf.mxu0
    %v170 = vadd.f32 0.0, %v169
    %171 = vdwg.mxu0
    %172 = vmatpush.bf16.msra.mxu0 0
    %173 = vmatpush.bf16.msra.mxu0 0
    %174 = vmatpush.bf16.msra.mxu0 0
    %175 = vmatpush.bf16.msra.mxu0 0
    %176 = vmatpush.bf16.msra.mxu0 %v135
    %177 = vmatpush.bf16.msra.mxu0 %v131
    %178 = vmatpush.bf16.msra.mxu0 %v127
    %179 = vmatpush.bf16.msra.mxu0 %v123
    %180 = vmatmul.bf16.gmra.mxu0 %v156
    %v181 = vpop.f32.mrf.mxu0
    %v182 = vadd.f32 0.0, %v181
    %v183 = vpop.f32.mrf.mxu0
    %v184 = vadd.f32 0.0, %v183
    %185 = vdwg.mxu0
    %186 = vmatpush.bf16.msra.mxu0 0
    %187 = vmatpush.bf16.msra.mxu0 0
    %188 = vmatpush.bf16.msra.mxu0 0
    %189 = vmatpush.bf16.msra.mxu0 0
    %190 = vmatpush.bf16.msra.mxu0 %v136
    %191 = vmatpush.bf16.msra.mxu0 %v132
    %192 = vmatpush.bf16.msra.mxu0 %v128
    %193 = vmatpush.bf16.msra.mxu0 %v124
    %194 = vmatmul.bf16.gmra.mxu0 %v156
    %v195 = vpop.f32.mrf.mxu0
    %v196 = vadd.f32 0.0, %v195
    %v197 = vpop.f32.mrf.mxu0
    %v198 = vadd.f32 0.0, %v197
    %199 = vdwg.mxu0
    %200 = vmatpush.bf16.msra.mxu0 0
    %201 = vmatpush.bf16.msra.mxu0 0
    %202 = vmatpush.bf16.msra.mxu0 0
    %203 = vmatpush.bf16.msra.mxu0 0
    %204 = vmatpush.bf16.msra.mxu0 %v137
    %205 = vmatpush.bf16.msra.mxu0 %v133
    %206 = vmatpush.bf16.msra.mxu0 %v129
    %207 = vmatpush.bf16.msra.mxu0 %v125
    %208 = vmatmul.bf16.gmra.mxu0 %v156
    %v209 = vpop.f32.mrf.mxu0
    %v210 = vadd.f32 0.0, %v209
    %v211 = vpop.f32.mrf.mxu0
    %v212 = vadd.f32 0.0, %v211
    %213 = vdwg.mxu0
    %v214 = vpack.c.bf16 %v182, %v168
    %v215 = vpack.c.bf16 %v210, %v196
    %v216 = vpack.c.bf16 %v184, %v170
    %v217 = vpack.c.bf16 %v212, %v198
    %219 = vst [vmem:[#allocation1] ss:$9 sm:$0xff] %v53
    %v220 = vld [vmem:[#allocation1] sm:$0xff]
    %v221 = vld [vmem:[#allocation1 + $0x9] sm:$0xff]
    %v222 = vld [vmem:[#allocation1 + $0x12] sm:$0xff]
    %v223 = vld [vmem:[#allocation1 + $0x1b] sm:$0xff]
    %v224 = vpack.i.b16 %v220, %v220
    %v226 = vperm.slane %v224, 0
    %v227 = vpack.i.b16 %v221, %v221
    %v229 = vperm.slane %v227, 0
    %v230 = vpack.i.b16 %v222, %v222
    %v232 = vperm.slane %v230, 0
    %v233 = vpack.i.b16 %v223, %v223
    %v235 = vperm.slane %v233, 0
    %v236 = vunpack.c.l.bf16 %v214
    %v237 = vunpack.c.h.bf16 %v214
    %v238 = vunpack.c.l.bf16 %v215
    %v239 = vunpack.c.h.bf16 %v215
    %v240 = vunpack.c.l.bf16 %v216
    %v241 = vunpack.c.h.bf16 %v216
    %v242 = vunpack.c.l.bf16 %v217
    %v243 = vunpack.c.h.bf16 %v217
    %v244 = vunpack.c.l.bf16 %v226
    %v245 = vunpack.c.l.bf16 %v229
    %v246 = vunpack.c.l.bf16 %v232
    %v247 = vunpack.c.l.bf16 %v235
    %v248 = vadd.f32 %v236, %v244
    %v249 = vadd.f32 %v237, %v245
    %v250 = vadd.f32 %v238, %v246
    %v251 = vadd.f32 %v239, %v247
    %v252 = vadd.f32 %v240, %v244
    %v253 = vadd.f32 %v241, %v245
    %v254 = vadd.f32 %v242, %v246
    %v255 = vadd.f32 %v243, %v247
    %v256 = vpack.c.bf16 %v249, %v248
    %v257 = vpack.c.bf16 %v251, %v250
    %v258 = vpack.c.bf16 %v253, %v252
    %v259 = vpack.c.bf16 %v255, %v254
    %v260 = vunpack.c.l.bf16 %v256
    %v261 = vunpack.c.h.bf16 %v256
    %v262 = vunpack.c.l.bf16 %v257
    %v263 = vunpack.c.h.bf16 %v257
    %v264 = vunpack.c.l.bf16 %v258
    %v265 = vunpack.c.h.bf16 %v258
    %v266 = vunpack.c.l.bf16 %v259
    %v267 = vunpack.c.h.bf16 %v259
    %v268 = vmax.f32 %v260, 0.0
    %v269 = vmax.f32 %v261, 0.0
    %v270 = vmax.f32 %v262, 0.0
    %v271 = vmax.f32 %v263, 0.0
    %v272 = vmax.f32 %v264, 0.0
    %v273 = vmax.f32 %v265, 0.0
    %v274 = vmax.f32 %v266, 0.0
    %v275 = vmax.f32 %v267, 0.0
    %v276 = vpack.c.bf16 %v272, %v268
    %v277 = vpack.c.bf16 %v273, %v269
    %v278 = vpack.c.bf16 %v274, %v270
    %v279 = vpack.c.bf16 %v275, %v271
    %v280 = vld [vmem:[#allocation4] sm:$0xf]
    %v281 = vld [vmem:[#allocation4 + $0x4] sm:$0xf]
    %v282 = vld [vmem:[#allocation4 + $0x8] sm:$0xf]
    %v283 = vld [vmem:[#allocation4 + $0xc] sm:$0xf]
    %v284 = vld [vmem:[#allocation4 + $0x10] sm:$0xf]
    %v285 = vld [vmem:[#allocation4 + $0x14] sm:$0xf]
    %v286 = vld [vmem:[#allocation4 + $0x18] sm:$0xf]
    %v287 = vld [vmem:[#allocation4 + $0x1c] sm:$0xf]
    %v288 = vld [vmem:[#allocation4 + $0x20] sm:$0xf]
    %v289 = vld [vmem:[#allocation4 + $0x24] sm:$0xf]
    %v290 = vld [vmem:[#allocation4 + $0x28] sm:$0xf]
    %v291 = vld [vmem:[#allocation4 + $0x2c] sm:$0xf]
    %v292 = vld [vmem:[#allocation4 + $0x30] sm:$0xf]
    %v293 = vld [vmem:[#allocation4 + $0x34] sm:$0xf]
    %v294 = vld [vmem:[#allocation4 + $0x38] sm:$0xf]
    %v295 = vld [vmem:[#allocation4 + $0x3c] sm:$0xf]
    %v296 = vld [vmem:[#allocation4 + $0x40] sm:$0xf]
    %v297 = vld [vmem:[#allocation4 + $0x44] sm:$0xf]
    %v298 = vld [vmem:[#allocation4 + $0x48] sm:$0xf]
    %v299 = vld [vmem:[#allocation4 + $0x4c] sm:$0xf]
    %v300 = vld [vmem:[#allocation4 + $0x50] sm:$0xf]
    %v301 = vld [vmem:[#allocation4 + $0x54] sm:$0xf]
    %v302 = vld [vmem:[#allocation4 + $0x58] sm:$0xf]
    %v303 = vld [vmem:[#allocation4 + $0x5c] sm:$0xf]
    %v304 = vld [vmem:[#allocation4 + $0x60] sm:$0xf]
    %v305 = vld [vmem:[#allocation4 + $0x64] sm:$0xf]
    %v306 = vld [vmem:[#allocation4 + $0x68] sm:$0xf]
    %v307 = vld [vmem:[#allocation4 + $0x6c] sm:$0xf]
    %v308 = vld [vmem:[#allocation4 + $0x70] sm:$0xf]
    %v309 = vld [vmem:[#allocation4 + $0x74] sm:$0xf]
    %v310 = vld [vmem:[#allocation4 + $0x78] sm:$0xf]
    %v311 = vld [vmem:[#allocation4 + $0x7c] sm:$0xf]
    %v312 = vld [vmem:[#allocation4 + $0x80] sm:$0xf]
    %v313 = vld [vmem:[#allocation4 + $0x84] sm:$0xf]
    %v314 = vld [vmem:[#allocation4 + $0x88] sm:$0xf]
    %v315 = vld [vmem:[#allocation4 + $0x8c] sm:$0xf]
    %v316 = vld [vmem:[#allocation4 + $0x90] sm:$0xf]
    %v317 = vld [vmem:[#allocation4 + $0x94] sm:$0xf]
    %v318 = vld [vmem:[#allocation4 + $0x98] sm:$0xf]
    %v319 = vld [vmem:[#allocation4 + $0x9c] sm:$0xf]
    %v320 = vld [vmem:[#allocation4 + $0xa0] sm:$0xf]
    %v321 = vld [vmem:[#allocation4 + $0xa4] sm:$0xf]
    %v322 = vld [vmem:[#allocation4 + $0xa8] sm:$0xf]
    %v323 = vld [vmem:[#allocation4 + $0xac] sm:$0xf]
    %v324 = vld [vmem:[#allocation4 + $0xb0] sm:$0xf]
    %v325 = vld [vmem:[#allocation4 + $0xb4] sm:$0xf]
    %v326 = vld [vmem:[#allocation4 + $0xb8] sm:$0xf]
    %v327 = vld [vmem:[#allocation4 + $0xbc] sm:$0xf]
    %v328 = vld [vmem:[#allocation4 + $0xc0] sm:$0xf]
    %v329 = vld [vmem:[#allocation4 + $0xc4] sm:$0xf]
    %v330 = vld [vmem:[#allocation4 + $0xc8] sm:$0xf]
    %v331 = vld [vmem:[#allocation4 + $0xcc] sm:$0xf]
    %v332 = vld [vmem:[#allocation4 + $0xd0] sm:$0xf]
    %v333 = vld [vmem:[#allocation4 + $0xd4] sm:$0xf]
    %v334 = vld [vmem:[#allocation4 + $0xd8] sm:$0xf]
    %v335 = vld [vmem:[#allocation4 + $0xdc] sm:$0xf]
    %v336 = vld [vmem:[#allocation4 + $0xe0] sm:$0xf]
    %v337 = vld [vmem:[#allocation4 + $0xe4] sm:$0xf]
    %v338 = vld [vmem:[#allocation4 + $0xe8] sm:$0xf]
    %v339 = vld [vmem:[#allocation4 + $0xec] sm:$0xf]
    %v340 = vld [vmem:[#allocation4 + $0xf0] sm:$0xf]
    %v341 = vld [vmem:[#allocation4 + $0xf4] sm:$0xf]
    %v342 = vld [vmem:[#allocation4 + $0xf8] sm:$0xf]
    %v343 = vld [vmem:[#allocation4 + $0xfc] sm:$0xf]
    %v345 = vperm.slane %v54, 0
    %v411 = vunpack.c.l.b16 %v280
    %v412 = vunpack.c.l.b16 %v281
    %v413 = vunpack.c.l.b16 %v282
    %v414 = vunpack.c.l.b16 %v283
    %v415 = vunpack.c.l.b16 %v284
    %v416 = vunpack.c.l.b16 %v285
    %v417 = vunpack.c.l.b16 %v286
    %v418 = vunpack.c.l.b16 %v287
    %v419 = vunpack.c.l.b16 %v288
    %v420 = vunpack.c.l.b16 %v289
    %v421 = vunpack.c.l.b16 %v290
    %v422 = vunpack.c.l.b16 %v291
    %v423 = vunpack.c.l.b16 %v292
    %v424 = vunpack.c.l.b16 %v293
    %v425 = vunpack.c.l.b16 %v294
    %v426 = vunpack.c.l.b16 %v295
    %v427 = vunpack.c.l.b16 %v296
    %v428 = vunpack.c.l.b16 %v297
    %v429 = vunpack.c.l.b16 %v298
    %v430 = vunpack.c.l.b16 %v299
    %v431 = vunpack.c.l.b16 %v300
    %v432 = vunpack.c.l.b16 %v301
    %v433 = vunpack.c.l.b16 %v302
    %v434 = vunpack.c.l.b16 %v303
    %v435 = vunpack.c.l.b16 %v304
    %v436 = vunpack.c.l.b16 %v305
    %v437 = vunpack.c.l.b16 %v306
    %v438 = vunpack.c.l.b16 %v307
    %v439 = vunpack.c.l.b16 %v308
    %v440 = vunpack.c.l.b16 %v309
    %v441 = vunpack.c.l.b16 %v310
    %v442 = vunpack.c.l.b16 %v311
    %v443 = vunpack.c.l.b16 %v312
    %v444 = vunpack.c.l.b16 %v313
    %v445 = vunpack.c.l.b16 %v314
    %v446 = vunpack.c.l.b16 %v315
    %v447 = vunpack.c.l.b16 %v316
    %v448 = vunpack.c.l.b16 %v317
    %v449 = vunpack.c.l.b16 %v318
    %v450 = vunpack.c.l.b16 %v319
    %v451 = vunpack.c.l.b16 %v320
    %v452 = vunpack.c.l.b16 %v321
    %v453 = vunpack.c.l.b16 %v322
    %v454 = vunpack.c.l.b16 %v323
    %v455 = vunpack.c.l.b16 %v324
    %v456 = vunpack.c.l.b16 %v325
    %v457 = vunpack.c.l.b16 %v326
    %v458 = vunpack.c.l.b16 %v327
    %v459 = vunpack.c.l.b16 %v328
    %v460 = vunpack.c.l.b16 %v329
    %v461 = vunpack.c.l.b16 %v330
    %v462 = vunpack.c.l.b16 %v331
    %v463 = vunpack.c.l.b16 %v332
    %v464 = vunpack.c.l.b16 %v333
    %v465 = vunpack.c.l.b16 %v334
    %v466 = vunpack.c.l.b16 %v335
    %v467 = vunpack.c.l.b16 %v336
    %v468 = vunpack.c.l.b16 %v337
    %v469 = vunpack.c.l.b16 %v338
    %v470 = vunpack.c.l.b16 %v339
    %v471 = vunpack.c.l.b16 %v340
    %v472 = vunpack.c.l.b16 %v341
    %v473 = vunpack.c.l.b16 %v342
    %v474 = vunpack.c.l.b16 %v343
    %v475 = vpack.c.b16 %v412, %v411
    %v476 = vpack.c.b16 %v414, %v413
    %v477 = vpack.c.b16 %v416, %v415
    %v478 = vpack.c.b16 %v418, %v417
    %v479 = vpack.c.b16 %v420, %v419
    %v480 = vpack.c.b16 %v422, %v421
    %v481 = vpack.c.b16 %v424, %v423
    %v482 = vpack.c.b16 %v426, %v425
    %v483 = vpack.c.b16 %v428, %v427
    %v484 = vpack.c.b16 %v430, %v429
    %v485 = vpack.c.b16 %v432, %v431
    %v486 = vpack.c.b16 %v434, %v433
    %v487 = vpack.c.b16 %v436, %v435
    %v488 = vpack.c.b16 %v438, %v437
    %v489 = vpack.c.b16 %v440, %v439
    %v490 = vpack.c.b16 %v442, %v441
    %v491 = vpack.c.b16 %v444, %v443
    %v492 = vpack.c.b16 %v446, %v445
    %v493 = vpack.c.b16 %v448, %v447
    %v494 = vpack.c.b16 %v450, %v449
    %v495 = vpack.c.b16 %v452, %v451
    %v496 = vpack.c.b16 %v454, %v453
    %v497 = vpack.c.b16 %v456, %v455
    %v498 = vpack.c.b16 %v458, %v457
    %v499 = vpack.c.b16 %v460, %v459
    %v500 = vpack.c.b16 %v462, %v461
    %v501 = vpack.c.b16 %v464, %v463
    %v502 = vpack.c.b16 %v466, %v465
    %v503 = vpack.c.b16 %v468, %v467
    %v504 = vpack.c.b16 %v470, %v469
    %v505 = vpack.c.b16 %v472, %v471
    %v506 = vpack.c.b16 %v474, %v473
    %539 = vmatpush.bf16.msra.mxu0 %v482
    %540 = vmatpush.bf16.msra.mxu0 %v481
    %541 = vmatpush.bf16.msra.mxu0 %v480
    %542 = vmatpush.bf16.msra.mxu0 %v479
    %543 = vmatpush.bf16.msra.mxu0 %v478
    %544 = vmatpush.bf16.msra.mxu0 %v477
    %545 = vmatpush.bf16.msra.mxu0 %v476
    %546 = vmatpush.bf16.msra.mxu0 %v475
    %547 = vmatmul.bf16.gmra.mxu0 %v276
    %v548 = vpop.f32.mrf.mxu0
    %v549 = vadd.f32 %v345, %v548
    %v550 = vpop.f32.mrf.mxu0
    %v551 = vadd.f32 %v345, %v550
    %552 = vdwg.mxu0
    %553 = vmatpush.bf16.msra.mxu0 %v490
    %554 = vmatpush.bf16.msra.mxu0 %v489
    %555 = vmatpush.bf16.msra.mxu0 %v488
    %556 = vmatpush.bf16.msra.mxu0 %v487
    %557 = vmatpush.bf16.msra.mxu0 %v486
    %558 = vmatpush.bf16.msra.mxu0 %v485
    %559 = vmatpush.bf16.msra.mxu0 %v484
    %560 = vmatpush.bf16.msra.mxu0 %v483
    %561 = vmatmul.bf16.gmra.mxu0 %v277
    %v562 = vpop.f32.mrf.mxu0
    %v563 = vadd.f32 %v549, %v562
    %v564 = vpop.f32.mrf.mxu0
    %v565 = vadd.f32 %v551, %v564
    %566 = vdwg.mxu0
    %567 = vmatpush.bf16.msra.mxu0 %v498
    %568 = vmatpush.bf16.msra.mxu0 %v497
    %569 = vmatpush.bf16.msra.mxu0 %v496
    %570 = vmatpush.bf16.msra.mxu0 %v495
    %571 = vmatpush.bf16.msra.mxu0 %v494
    %572 = vmatpush.bf16.msra.mxu0 %v493
    %573 = vmatpush.bf16.msra.mxu0 %v492
    %574 = vmatpush.bf16.msra.mxu0 %v491
    %575 = vmatmul.bf16.gmra.mxu0 %v278
    %v576 = vpop.f32.mrf.mxu0
    %v577 = vadd.f32 %v563, %v576
    %v578 = vpop.f32.mrf.mxu0
    %v579 = vadd.f32 %v565, %v578
    %580 = vdwg.mxu0
    %581 = vmatpush.bf16.msra.mxu0 %v506
    %582 = vmatpush.bf16.msra.mxu0 %v505
    %583 = vmatpush.bf16.msra.mxu0 %v504
    %584 = vmatpush.bf16.msra.mxu0 %v503
    %585 = vmatpush.bf16.msra.mxu0 %v502
    %586 = vmatpush.bf16.msra.mxu0 %v501
    %587 = vmatpush.bf16.msra.mxu0 %v500
    %588 = vmatpush.bf16.msra.mxu0 %v499
    %589 = vmatmul.bf16.gmra.mxu0 %v279
    %v590 = vpop.f32.mrf.mxu0
    %v591 = vadd.f32 %v577, %v590
    %v592 = vpop.f32.mrf.mxu0
    %v593 = vadd.f32 %v579, %v592
    %594 = vdwg.mxu0
    %v595 = vmax.f32 %v591, 0.0
    %v596 = vmax.f32 %v593, 0.0
    %597 = vst [vmem:[#allocation6] sm:$0xff] %v595
    %598 = vst [vmem:[#allocation6 + $0x8] sm:$0xff] %v596
    // Predicated region
    $region30: #{_setnet_call.1} parent=1 // pred_check
      _
    $region31: #{_setnet_call.1} parent=1 // pred_check_branch
      %600 = sbr.rel (0) target = $region33
    $region32: #{_setnet_call.1} parent=1 // pred_region
      // Predicated region
      $region34: #{_setnet_call.1} parent=32 // pred_check
        _
      $region35: #{_setnet_call.1} parent=32 // pred_check_branch
        %602 = sbr.rel (0) target = $region37
      $region36: #{_setnet_call.1} parent=32 // pred_region
        // Predicated region
        $region38: #{_setnet_call.1} parent=36 // pred_check
          _
        $region39: #{_setnet_call.1} parent=36 // pred_check_branch
          %604 = sbr.rel target = $region41
        $region40: #{_setnet_call.1} parent=36 // pred_region
          // Predicated region
          $region53: #{_setnet_call.1} parent=40 // pred_check
            _
          $region54: #{_setnet_call.1} parent=40 // pred_check_branch
            %620 = sbr.rel (0) target = $region56
          $region55: #{_setnet_call.1} parent=40 // pred_region
            %s622 = ssub.s32 16, 1
            loop: start=0, step=1, limit=1
            $region57: #{_setnet_call.1} parent=55 // loop_pre_header
              _
            $region58: #{_setnet_call.1} parent=55 // loop_header
              %s624 = sphi 0, %s628
              %p625 = scmp.ge.s32.totalorder %s624, 1
              %s629 = sphi [#allocation6], [#allocation6]
              %s630 = sphi %s5, %s5
            $region59: #{_setnet_call.1} parent=55 // loop_header_branch
              %627 = sbr.rel (%p625) target = $region63
            $region60: #{_setnet_call.1} parent=55 // loop_body
              %v631 = vld [vmem:[%s629] sm:%s622]
              %632 = vst [vmem:[%s630] sm:%s622] %v631
            $region61: #{_setnet_call.1} parent=55 // loop_footer
              %s628 = sadd.s32 1, %s624
            $region62: #{_setnet_call.1} parent=55 // loop_footer_branch
              %623 = sbr.rel target = $region58
            $region63: #{_setnet_call.1} parent=55 // loop_exit
              _
          $region56: #{_setnet_call.1} parent=40 // pred_fallthru
            _
        $region41: #{_setnet_call.1} parent=36 // pred_fallthru
          _
        // Predicated region
        $region42: #{_setnet_call.1} parent=36 // pred_check
          _
        $region43: #{_setnet_call.1} parent=36 // pred_check_branch
          %606 = sbr.rel (0) target = $region45
        $region44: #{_setnet_call.1} parent=36 // pred_region
          %s608 = ssub.s32 16, 1
          loop: start=0, step=1, limit=1
          $region46: #{_setnet_call.1} parent=44 // loop_pre_header
            _
          $region47: #{_setnet_call.1} parent=44 // loop_header
            %s610 = sphi 0, %s614
            %p611 = scmp.ge.s32.totalorder %s610, 1
            %s615 = sphi [#allocation6], [#allocation6]
            %s616 = sphi %s5, %s5
          $region48: #{_setnet_call.1} parent=44 // loop_header_branch
            %613 = sbr.rel (%p611) target = $region52
          $region49: #{_setnet_call.1} parent=44 // loop_body
            %v617 = vld [vmem:[%s615] sm:%s608]
            %618 = vst [vmem:[%s616] sm:%s608] %v617
          $region50: #{_setnet_call.1} parent=44 // loop_footer
            %s614 = sadd.s32 1, %s610
          $region51: #{_setnet_call.1} parent=44 // loop_footer_branch
            %609 = sbr.rel target = $region47
          $region52: #{_setnet_call.1} parent=44 // loop_exit
            _
        $region45: #{_setnet_call.1} parent=36 // pred_fallthru
          _
      $region37: #{_setnet_call.1} parent=32 // pred_fallthru
        _
      %633 = vnop
    $region33: #{_setnet_call.1} parent=1 // pred_fallthru
      _
    // Predicated region
    $region64: #{_setnet_call.1} parent=1 // pred_check
      _
    $region65: #{_setnet_call.1} parent=1 // pred_check_branch
      %635 = sbr.rel (0) target = $region67
    $region66: #{_setnet_call.1} parent=1 // pred_region
      _
    $region67: #{_setnet_call.1} parent=1 // pred_fallthru
      _
    %636 = vsyncpa [#allocation3], 1
    %637 = vsyncpa [#allocation5], 1

</llo_original>
